<compile_context>
chip_gen: v5e
topology: v5e:2x2
jax: 0.10.0
libtpu: 0.0.40
codegen_flags: <defaults>
</compile_context>

<pallas_src>
import jax
import jax.numpy as jnp
from jax.experimental import pallas as pl
from jax.experimental.pallas import tpu as pltpu


def _round_up(x, m):
    return (x + m - 1) // m * m


def _embed_kernel(x_ref, w1_ref, b1_ref, w2m_ref, w2s_ref, b2_ref, out_ref):
    # x_ref  : (Bblk, T+2p, F)  bf16   time-padded, time-major frames
    # w1_ref : (K, F, Cp)       bf16   per-tap conv weights
    # b1_ref : (1, Cp)          f32
    # w2m/w2s: (Cp, Ep)         bf16   projection for mean / std halves
    # b2_ref : (1, Ep)          f32
    # out_ref: (Bblk, Ep)       f32
    bblk, t_pad, feat = x_ref.shape
    k_taps, _, c_pad = w1_ref.shape
    pad = (k_taps - 1) // 2
    t = t_pad - 2 * pad

    x = x_ref[...]                                               # (Bblk, T+2p, F) bf16

    # TDNN conv (kernel K, pad) as a sum of K shifted MXU matmuls; no HBM unfold.
    acc = jnp.zeros((bblk * t, c_pad), jnp.float32)
    for k in range(k_taps):                                      # static unrolled
        xs = x[:, k:k + t, :].reshape(bblk * t, feat)            # bf16 (Bblk*T, F)
        acc += jnp.dot(xs, w1_ref[k], preferred_element_type=jnp.float32)

    h = jnp.maximum(acc + b1_ref[...], 0.0)                      # (Bblk*T, Cp) f32
    h = h.reshape(bblk, t, c_pad)

    # Statistics pooling over time (two-pass, numerically stable), in f32.
    mean = jnp.mean(h, axis=1)                                   # (Bblk, Cp)
    var = jnp.mean((h - mean[:, None, :]) ** 2, axis=1)          # (Bblk, Cp)
    std = jnp.sqrt(var + 1e-5)

    # Embedding projection: mean @ W_mean + std @ W_std + b (no lane concat).
    emb = jnp.dot(mean.astype(jnp.bfloat16), w2m_ref[...],
                  preferred_element_type=jnp.float32)
    emb += jnp.dot(std.astype(jnp.bfloat16), w2s_ref[...],
                   preferred_element_type=jnp.float32)
    emb += b2_ref[...]
    out_ref[...] = emb.astype(out_ref.dtype)


def embedding_forward(feats, w_conv, b_conv, w_proj, b_proj, *, block_b=None):
    """feats: (B, F, T) f32.  w_conv: (C, F, K) (PyTorch Conv1d layout),
    b_conv: (C,), w_proj: (2C, E), b_proj: (E,).  Returns embeddings (B, E)."""
    B, F, T = feats.shape
    C, F_w, K = w_conv.shape
    assert F_w == F
    twoC, E = w_proj.shape
    assert twoC == 2 * C
    pad = (K - 1) // 2

    # Lane-dense channel / embedding dims (multiples of 128).
    Cp = _round_up(C, 128)
    Ep = _round_up(E, 128)

    # Batch blocking: multiple of 8 sublanes, >=2 grid steps when possible.
    if block_b is None:
        block_b = 8 if B % 8 == 0 else B
    assert B % block_b == 0
    grid = (B // block_b,)

    # --- host-side glue (done once): layout, zero-padding, bf16 casts ---
    x_t = jnp.transpose(feats, (0, 2, 1))                        # (B, T, F)
    x_t = jnp.pad(x_t, ((0, 0), (pad, pad), (0, 0))).astype(jnp.bfloat16)

    # per-tap weights: w1[k, f, c] = w_conv[c, f, k], zero-padded to Cp lanes.
    w1 = jnp.transpose(w_conv, (2, 1, 0))                        # (K, F, C)
    w1 = jnp.pad(w1, ((0, 0), (0, 0), (0, Cp - C))).astype(jnp.bfloat16)
    b1 = jnp.pad(b_conv, (0, Cp - C)).reshape(1, Cp).astype(jnp.float32)

    w2m = jnp.pad(w_proj[:C], ((0, Cp - C), (0, Ep - E))).astype(jnp.bfloat16)
    w2s = jnp.pad(w_proj[C:], ((0, Cp - C), (0, Ep - E))).astype(jnp.bfloat16)
    b2 = jnp.pad(b_proj, (0, Ep - E)).reshape(1, Ep).astype(jnp.float32)

    out = pl.pallas_call(
        _embed_kernel,
        out_shape=jax.ShapeDtypeStruct((B, Ep), jnp.float32),
        grid_spec=pltpu.PrefetchScalarGridSpec(
            num_scalar_prefetch=0,
            grid=grid,
            in_specs=[
                pl.BlockSpec((block_b, T + 2 * pad, F), lambda b: (b, 0, 0)),
                pl.BlockSpec((K, F, Cp), lambda b: (0, 0, 0)),
                pl.BlockSpec((1, Cp), lambda b: (0, 0)),
                pl.BlockSpec((Cp, Ep), lambda b: (0, 0)),
                pl.BlockSpec((Cp, Ep), lambda b: (0, 0)),
                pl.BlockSpec((1, Ep), lambda b: (0, 0)),
            ],
            out_specs=pl.BlockSpec((block_b, Ep), lambda b: (b, 0)),
        ),
        compiler_params=pltpu.CompilerParams(
            dimension_semantics=("parallel",),
            vmem_limit_bytes=32 * 1024 * 1024,
        ),
    )(x_t, w1, b1, w2m, w2s, b2)
    return out[:, :E]


def _reference(feats, w_conv, b_conv, w_proj, b_proj):
    """Plain-JAX f32 reference of the same forward pass."""
    B, F, T = feats.shape
    C, _, K = w_conv.shape
    pad = (K - 1) // 2
    x_pad = jnp.pad(feats, ((0, 0), (0, 0), (pad, pad)))         # (B, F, T+2p)
    cols = [x_pad[:, :, k:k + T] for k in range(K)]
    x_unf = jnp.stack(cols, axis=1)                              # (B, K, F, T)
    x_unf = jnp.transpose(x_unf, (0, 3, 1, 2)).reshape(B, T, K * F)
    w1 = jnp.transpose(w_conv, (2, 1, 0)).reshape(K * F, C)
    h = jnp.maximum(jnp.einsum("btk,kc->btc", x_unf, w1) + b_conv, 0.0)
    mean = jnp.mean(h, axis=1)
    std = jnp.sqrt(jnp.mean((h - mean[:, None, :]) ** 2, axis=1) + 1e-5)
    stats = jnp.concatenate([mean, std], axis=-1)
    return stats @ w_proj + b_proj


if __name__ == "__main__":
    # Small shapes consistent with a speaker-embedding forward pass.
    B, F, T = 16, 32, 16      # batch, feature bins (n_mels), frames
    K, C, E = 3, 64, 64       # conv kernel, conv channels, embedding dim

    key = jax.random.PRNGKey(0)
    k_feat, k_w1, k_b1, k_w2, k_b2 = jax.random.split(key, 5)

    feats = jax.random.normal(k_feat, (B, F, T), dtype=jnp.float32)
    w_conv = jax.random.normal(k_w1, (C, F, K), dtype=jnp.float32) * 0.05
    b_conv = jax.random.normal(k_b1, (C,), dtype=jnp.float32) * 0.01
    w_proj = jax.random.normal(k_w2, (2 * C, E), dtype=jnp.float32) * 0.05
    b_proj = jax.random.normal(k_b2, (E,), dtype=jnp.float32) * 0.01

    emb = embedding_forward(feats, w_conv, b_conv, w_proj, b_proj, block_b=8)
    emb = jax.block_until_ready(emb)

    ref = _reference(feats, w_conv, b_conv, w_proj, b_proj)
    assert emb.shape == (B, E)
    # bf16 MXU inputs -> slightly looser tolerance than pure f32.
    assert jnp.allclose(emb, ref, atol=3e-2, rtol=3e-2), float(
        jnp.max(jnp.abs(emb - ref)))

    print("KERNEL_OK")
</pallas_src>

<mosaic_0001>
module attributes {stable_mosaic.version = 11 : i64} {
  func.func @_embed_kernel(%arg0: i32, %arg1: memref<8x18x32xbf16, #tpu.memory_space<vmem>>, %arg2: memref<3x32x128xbf16, #tpu.memory_space<vmem>>, %arg3: memref<1x128xf32, #tpu.memory_space<vmem>>, %arg4: memref<128x128xbf16, #tpu.memory_space<vmem>>, %arg5: memref<128x128xbf16, #tpu.memory_space<vmem>>, %arg6: memref<1x128xf32, #tpu.memory_space<vmem>>, %arg7: memref<8x128xf32, #tpu.memory_space<vmem>>) attributes {dimension_semantics = [#tpu.dimension_semantics<parallel>], iteration_bounds = array<i64: 2>, scalar_prefetch = 0 : i64, scratch_operands = 0 : i64, tpu.core_type = #tpu.core_type<tc>, window_params = [{transform_indices = @transform_0, window_bounds = array<i64: 8, 18, 32>}, {pipeline_mode = #tpu.pipeline_mode<synchronous>, transform_indices = @transform_1, window_bounds = array<i64: 3, 32, 128>}, {pipeline_mode = #tpu.pipeline_mode<synchronous>, transform_indices = @transform_2, window_bounds = array<i64: 1, 128>}, {pipeline_mode = #tpu.pipeline_mode<synchronous>, transform_indices = @transform_3, window_bounds = array<i64: 128, 128>}, {pipeline_mode = #tpu.pipeline_mode<synchronous>, transform_indices = @transform_4, window_bounds = array<i64: 128, 128>}, {pipeline_mode = #tpu.pipeline_mode<synchronous>, transform_indices = @transform_5, window_bounds = array<i64: 1, 128>}, {transform_indices = @transform_6, window_bounds = array<i64: 8, 128>}]} {
    %c0 = arith.constant 0 : index
    %c0_0 = arith.constant 0 : index
    %c0_1 = arith.constant 0 : index
    %0 = vector.load %arg1[%c0, %c0_0, %c0_1] : memref<8x18x32xbf16, #tpu.memory_space<vmem>>, vector<8x18x32xbf16>
    %cst = arith.constant 0.000000e+00 : f32
    %1 = vector.broadcast %cst : f32 to vector<128x128xf32>
    %2 = vector.extract_strided_slice %0 {offsets = [0, 0, 0], sizes = [8, 16, 32], strides = [1, 1, 1]} : vector<8x18x32xbf16> to vector<8x16x32xbf16>
    %3 = vector.shape_cast %2 : vector<8x16x32xbf16> to vector<128x32xbf16>
    %c0_2 = arith.constant 0 : index
    %c0_3 = arith.constant 0 : index
    %c0_4 = arith.constant 0 : index
    %4 = vector.load %arg2[%c0_2, %c0_3, %c0_4] : memref<3x32x128xbf16, #tpu.memory_space<vmem>>, vector<1x32x128xbf16>
    %5 = vector.shape_cast %4 : vector<1x32x128xbf16> to vector<32x128xbf16>
    %cst_5 = arith.constant dense<0.000000e+00> : vector<128x128xf32>
    %6 = tpu.matmul %3, %5, %cst_5 {dimension_numbers = #tpu.dot_dimension_numbers<[1], [0], [0], [1], [0, 0, 1, 1], [], []>} : vector<128x32xbf16>, vector<32x128xbf16>, vector<128x128xf32> -> vector<128x128xf32>
    %7 = arith.addf %1, %6 : vector<128x128xf32>
    %8 = vector.extract_strided_slice %0 {offsets = [0, 1, 0], sizes = [8, 16, 32], strides = [1, 1, 1]} : vector<8x18x32xbf16> to vector<8x16x32xbf16>
    %9 = vector.shape_cast %8 : vector<8x16x32xbf16> to vector<128x32xbf16>
    %c1 = arith.constant 1 : index
    %c0_6 = arith.constant 0 : index
    %c0_7 = arith.constant 0 : index
    %10 = vector.load %arg2[%c1, %c0_6, %c0_7] : memref<3x32x128xbf16, #tpu.memory_space<vmem>>, vector<1x32x128xbf16>
    %11 = vector.shape_cast %10 : vector<1x32x128xbf16> to vector<32x128xbf16>
    %cst_8 = arith.constant dense<0.000000e+00> : vector<128x128xf32>
    %12 = tpu.matmul %9, %11, %cst_8 {dimension_numbers = #tpu.dot_dimension_numbers<[1], [0], [0], [1], [0, 0, 1, 1], [], []>} : vector<128x32xbf16>, vector<32x128xbf16>, vector<128x128xf32> -> vector<128x128xf32>
    %13 = arith.addf %7, %12 : vector<128x128xf32>
    %14 = vector.extract_strided_slice %0 {offsets = [0, 2, 0], sizes = [8, 16, 32], strides = [1, 1, 1]} : vector<8x18x32xbf16> to vector<8x16x32xbf16>
    %15 = vector.shape_cast %14 : vector<8x16x32xbf16> to vector<128x32xbf16>
    %c2 = arith.constant 2 : index
    %c0_9 = arith.constant 0 : index
    %c0_10 = arith.constant 0 : index
    %16 = vector.load %arg2[%c2, %c0_9, %c0_10] : memref<3x32x128xbf16, #tpu.memory_space<vmem>>, vector<1x32x128xbf16>
    %17 = vector.shape_cast %16 : vector<1x32x128xbf16> to vector<32x128xbf16>
    %cst_11 = arith.constant dense<0.000000e+00> : vector<128x128xf32>
    %18 = tpu.matmul %15, %17, %cst_11 {dimension_numbers = #tpu.dot_dimension_numbers<[1], [0], [0], [1], [0, 0, 1, 1], [], []>} : vector<128x32xbf16>, vector<32x128xbf16>, vector<128x128xf32> -> vector<128x128xf32>
    %19 = arith.addf %13, %18 : vector<128x128xf32>
    %c0_12 = arith.constant 0 : index
    %c0_13 = arith.constant 0 : index
    %20 = vector.load %arg3[%c0_12, %c0_13] : memref<1x128xf32, #tpu.memory_space<vmem>>, vector<1x128xf32>
    %21 = vector.broadcast %20 : vector<1x128xf32> to vector<128x128xf32>
    %22 = arith.addf %19, %21 : vector<128x128xf32>
    %cst_14 = arith.constant 0.000000e+00 : f32
    %23 = vector.broadcast %cst_14 : f32 to vector<128x128xf32>
    %24 = arith.maximumf %22, %23 : vector<128x128xf32>
    %25 = vector.shape_cast %24 : vector<128x128xf32> to vector<8x16x128xf32>
    %cst_15 = arith.constant dense<0.000000e+00> : vector<8x128xf32>
    %26 = vector.multi_reduction <add>, %25, %cst_15 [1] : vector<8x16x128xf32> to vector<8x128xf32>
    %cst_16 = arith.constant 1.600000e+01 : f32
    %27 = vector.broadcast %cst_16 : f32 to vector<8x128xf32>
    %28 = arith.divf %26, %27 : vector<8x128xf32>
    %29 = vector.shape_cast %28 : vector<8x128xf32> to vector<8x1x128xf32>
    %30 = vector.broadcast %29 : vector<8x1x128xf32> to vector<8x16x128xf32>
    %31 = arith.subf %25, %30 : vector<8x16x128xf32>
    %32 = arith.mulf %31, %31 : vector<8x16x128xf32>
    %cst_17 = arith.constant dense<0.000000e+00> : vector<8x128xf32>
    %33 = vector.multi_reduction <add>, %32, %cst_17 [1] : vector<8x16x128xf32> to vector<8x128xf32>
    %cst_18 = arith.constant 1.600000e+01 : f32
    %34 = vector.broadcast %cst_18 : f32 to vector<8x128xf32>
    %35 = arith.divf %33, %34 : vector<8x128xf32>
    %cst_19 = arith.constant 9.99999974E-6 : f32
    %36 = vector.broadcast %cst_19 : f32 to vector<8x128xf32>
    %37 = arith.addf %35, %36 : vector<8x128xf32>
    %38 = math.sqrt %37 : vector<8x128xf32>
    %39 = arith.truncf %28 : vector<8x128xf32> to vector<8x128xbf16>
    %c0_20 = arith.constant 0 : index
    %c0_21 = arith.constant 0 : index
    %40 = vector.load %arg4[%c0_20, %c0_21] : memref<128x128xbf16, #tpu.memory_space<vmem>>, vector<128x128xbf16>
    %cst_22 = arith.constant dense<0.000000e+00> : vector<8x128xf32>
    %41 = tpu.matmul %39, %40, %cst_22 {dimension_numbers = #tpu.dot_dimension_numbers<[1], [0], [0], [1], [0, 0, 1, 1], [], []>} : vector<8x128xbf16>, vector<128x128xbf16>, vector<8x128xf32> -> vector<8x128xf32>
    %42 = arith.truncf %38 : vector<8x128xf32> to vector<8x128xbf16>
    %c0_23 = arith.constant 0 : index
    %c0_24 = arith.constant 0 : index
    %43 = vector.load %arg5[%c0_23, %c0_24] : memref<128x128xbf16, #tpu.memory_space<vmem>>, vector<128x128xbf16>
    %cst_25 = arith.constant dense<0.000000e+00> : vector<8x128xf32>
    %44 = tpu.matmul %42, %43, %cst_25 {dimension_numbers = #tpu.dot_dimension_numbers<[1], [0], [0], [1], [0, 0, 1, 1], [], []>} : vector<8x128xbf16>, vector<128x128xbf16>, vector<8x128xf32> -> vector<8x128xf32>
    %45 = arith.addf %41, %44 : vector<8x128xf32>
    %c0_26 = arith.constant 0 : index
    %c0_27 = arith.constant 0 : index
    %46 = vector.load %arg6[%c0_26, %c0_27] : memref<1x128xf32, #tpu.memory_space<vmem>>, vector<1x128xf32>
    %47 = vector.broadcast %46 : vector<1x128xf32> to vector<8x128xf32>
    %48 = arith.addf %45, %47 : vector<8x128xf32>
    %c0_28 = arith.constant 0 : index
    %c0_29 = arith.constant 0 : index
    %49 = vector.load %arg7[%c0_28, %c0_29] : memref<8x128xf32, #tpu.memory_space<vmem>>, vector<8x128xf32>
    tpu.vector_store %arg7[%c0_28, %c0_29], %48 {strides = array<i32>} : memref<8x128xf32, #tpu.memory_space<vmem>>, vector<8x128xf32>,
    return
  }
  func.func @transform_0(%arg0: i32) -> (i32, i32, i32) {
    %c0_i32 = arith.constant 0 : i32
    %c0_i32_0 = arith.constant 0 : i32
    %c0_i32_1 = arith.constant 0 : i32
    return %arg0, %c0_i32, %c0_i32_0 : i32, i32, i32
  }
  func.func @transform_1(%arg0: i32) -> (i32, i32, i32) {
    %c0_i32 = arith.constant 0 : i32
    %c0_i32_0 = arith.constant 0 : i32
    %c0_i32_1 = arith.constant 0 : i32
    %c0_i32_2 = arith.constant 0 : i32
    return %c0_i32, %c0_i32_0, %c0_i32_1 : i32, i32, i32
  }
  func.func @transform_2(%arg0: i32) -> (i32, i32) {
    %c0_i32 = arith.constant 0 : i32
    %c0_i32_0 = arith.constant 0 : i32
    %c0_i32_1 = arith.constant 0 : i32
    return %c0_i32, %c0_i32_0 : i32, i32
  }
  func.func @transform_3(%arg0: i32) -> (i32, i32) {
    %c0_i32 = arith.constant 0 : i32
    %c0_i32_0 = arith.constant 0 : i32
    %c0_i32_1 = arith.constant 0 : i32
    return %c0_i32, %c0_i32_0 : i32, i32
  }
  func.func @transform_4(%arg0: i32) -> (i32, i32) {
    %c0_i32 = arith.constant 0 : i32
    %c0_i32_0 = arith.constant 0 : i32
    %c0_i32_1 = arith.constant 0 : i32
    return %c0_i32, %c0_i32_0 : i32, i32
  }
  func.func @transform_5(%arg0: i32) -> (i32, i32) {
    %c0_i32 = arith.constant 0 : i32
    %c0_i32_0 = arith.constant 0 : i32
    %c0_i32_1 = arith.constant 0 : i32
    return %c0_i32, %c0_i32_0 : i32, i32
  }
  func.func @transform_6(%arg0: i32) -> (i32, i32) {
    %c0_i32 = arith.constant 0 : i32
    %c0_i32_0 = arith.constant 0 : i32
    return %arg0, %c0_i32 : i32, i32
  }
}

</mosaic_0001>

<llo_original>
// kernel: tpu_custom_call.1
$region0: #{tpu_custom_call.1}
  #allocation0 [shape = 'u32[]', space=smem, size = 0x4, offset = 0x4, fixed_abs, tag = 'smem constant byte address 0x4 - core index']
  #allocation1 [shape = 'u32[72,128]{1,0:T(1,128)}', space=vmem, size = 0x9000, scoped, tag = 'internal scratch']
  %s0 = inlined_call_operand.vmem [shape: bf16[16,18,32], index: 0, kind: input, shape index: {}]
  %s1 = inlined_call_operand.vmem [shape: bf16[3,32,128], index: 1, kind: input, shape index: {}]
  %s2 = inlined_call_operand.vmem [shape: f32[1,128], index: 2, kind: input, shape index: {}]
  %s3 = inlined_call_operand.vmem [shape: bf16[128,128], index: 3, kind: input, shape index: {}]
  %s4 = inlined_call_operand.vmem [shape: bf16[128,128], index: 4, kind: input, shape index: {}]
  %s5 = inlined_call_operand.vmem [shape: f32[1,128], index: 5, kind: input, shape index: {}]
  %s6 = inlined_call_operand.hbm [shape: f32[16,128], index: 6, kind: output, shape index: {}]
  %s7 = sld [smem:[#allocation0]]
  $region57: #{tpu_custom_call.1} parent=0
    _
  %s9 = ssub.s32 1, %s7
  %s10 = scalar_select 0, %s9, %s7
  $region1: #{tpu_custom_call.1} parent=0
    #allocation2 [shape = 'u8[8192]{0}', space=vmem, size = 0x2000, scoped, tag = 'output window, operand 0']
    #allocation3 [shape = 's32[2]{0}', space=sflag, size = 0x8, scoped, tag = 'scoped memory for tpu_custom_call.1']
    %11 = vsyncpa [#allocation3], 0
    %s12 = scalar_lea.sflag [#allocation3], 1
    %13 = vsyncpa %s12, 0
    loop: start=0, step=1, limit=4
    $region2: #{tpu_custom_call.1} parent=1 // loop_pre_header
      _
    $region3: #{tpu_custom_call.1} parent=1 // loop_header
      %s15 = sphi 0, %s19
      %p16 = scmp.ge.s32.totalorder %s15, 4
      %s25 = sphi 0, %s27
      %s28 = sphi 0, %s25
      %s29 = sphi 0, %s28
      %s45 = sphi 0, %s29
      %s49 = sphi 0, %s49
      %s51 = sphi 0, %s49
      %s52 = sphi 0, %s51
      %s66 = sphi 0, %s52
      %s70 = sphi 0, %s70
      %s72 = sphi 0, %s70
      %s73 = sphi 0, %s72
      %s87 = sphi 0, %s73
      %s91 = sphi 0, %s91
      %s93 = sphi 0, %s91
      %s94 = sphi 0, %s93
      %s108 = sphi 0, %s94
      %s112 = sphi 0, %s112
      %s114 = sphi 0, %s112
      %s115 = sphi 0, %s114
      %s129 = sphi 0, %s115
      %s133 = sphi 0, %s133
      %s135 = sphi 0, %s133
      %s136 = sphi 0, %s135
      %s150 = sphi 0, %s136
      %s156 = sphi 0, %s158
      %s159 = sphi 0, %s156
      %s160 = sphi 0, %s159
      %s176 = sphi 0, %s160
    $region4: #{tpu_custom_call.1} parent=1 // loop_header_branch
      %18 = sbr.rel (%p16) target = $region8
    $region5: #{tpu_custom_call.1} parent=1 // loop_body
      %s20 = ssub.s32 %s15, 1
      %s21 = ssub.s32 %s15, 2
      %s22 = sadd.s32 %s15, 1
      %s23 = ssub.s32 %s15, %s22
      %p24 = scmp.eq.s32.totalorder %s23, 0
      %s26 = sadd.s32 %s25, 1
      %s27 = scalar_select %p24, %s25, %s26
      %p30 = pneg %p24
      %p31 = scmp.eq.s32.totalorder %s15, 1
      %p32 = por %p30, %p31
      %p33 = scmp.ne.s32.totalorder %s25, %s28
      %p34 = scmp.eq.s32.totalorder %s15, 0
      %p35 = por %p33, %p34
      %p36 = scmp.ne.s32.totalorder %s25, %s28
      %p37 = scmp.eq.s32.totalorder %s20, 1
      %p38 = por %p36, %p37
      %p39 = scmp.ne.s32.totalorder %s28, %s29
      %p40 = scmp.eq.s32.totalorder %s20, 0
      %p41 = por %p39, %p40
      %p42 = scmp.ne.s32.totalorder %s28, %s29
      %p43 = scmp.eq.s32.totalorder %s21, 1
      %p44 = por %p42, %p43
      %p46 = scmp.ne.s32.totalorder %s29, %s45
      %p47 = scmp.eq.s32.totalorder %s21, 0
      %p48 = por %p46, %p47
      %s50 = sadd.s32 %s49, 1
      %p53 = scmp.eq.s32.totalorder %s15, 1
      %p54 = scmp.ne.s32.totalorder %s49, %s51
      %p55 = scmp.eq.s32.totalorder %s15, 0
      %p56 = por %p54, %p55
      %p57 = scmp.ne.s32.totalorder %s49, %s51
      %p58 = scmp.eq.s32.totalorder %s20, 1
      %p59 = por %p57, %p58
      %p60 = scmp.ne.s32.totalorder %s51, %s52
      %p61 = scmp.eq.s32.totalorder %s20, 0
      %p62 = por %p60, %p61
      %p63 = scmp.ne.s32.totalorder %s51, %s52
      %p64 = scmp.eq.s32.totalorder %s21, 1
      %p65 = por %p63, %p64
      %p67 = scmp.ne.s32.totalorder %s52, %s66
      %p68 = scmp.eq.s32.totalorder %s21, 0
      %p69 = por %p67, %p68
      %s71 = sadd.s32 %s70, 1
      %p74 = scmp.eq.s32.totalorder %s15, 1
      %p75 = scmp.ne.s32.totalorder %s70, %s72
      %p76 = scmp.eq.s32.totalorder %s15, 0
      %p77 = por %p75, %p76
      %p78 = scmp.ne.s32.totalorder %s70, %s72
      %p79 = scmp.eq.s32.totalorder %s20, 1
      %p80 = por %p78, %p79
      %p81 = scmp.ne.s32.totalorder %s72, %s73
      %p82 = scmp.eq.s32.totalorder %s20, 0
      %p83 = por %p81, %p82
      %p84 = scmp.ne.s32.totalorder %s72, %s73
      %p85 = scmp.eq.s32.totalorder %s21, 1
      %p86 = por %p84, %p85
      %p88 = scmp.ne.s32.totalorder %s73, %s87
      %p89 = scmp.eq.s32.totalorder %s21, 0
      %p90 = por %p88, %p89
      %s92 = sadd.s32 %s91, 1
      %p95 = scmp.eq.s32.totalorder %s15, 1
      %p96 = scmp.ne.s32.totalorder %s91, %s93
      %p97 = scmp.eq.s32.totalorder %s15, 0
      %p98 = por %p96, %p97
      %p99 = scmp.ne.s32.totalorder %s91, %s93
      %p100 = scmp.eq.s32.totalorder %s20, 1
      %p101 = por %p99, %p100
      %p102 = scmp.ne.s32.totalorder %s93, %s94
      %p103 = scmp.eq.s32.totalorder %s20, 0
      %p104 = por %p102, %p103
      %p105 = scmp.ne.s32.totalorder %s93, %s94
      %p106 = scmp.eq.s32.totalorder %s21, 1
      %p107 = por %p105, %p106
      %p109 = scmp.ne.s32.totalorder %s94, %s108
      %p110 = scmp.eq.s32.totalorder %s21, 0
      %p111 = por %p109, %p110
      %s113 = sadd.s32 %s112, 1
      %p116 = scmp.eq.s32.totalorder %s15, 1
      %p117 = scmp.ne.s32.totalorder %s112, %s114
      %p118 = scmp.eq.s32.totalorder %s15, 0
      %p119 = por %p117, %p118
      %p120 = scmp.ne.s32.totalorder %s112, %s114
      %p121 = scmp.eq.s32.totalorder %s20, 1
      %p122 = por %p120, %p121
      %p123 = scmp.ne.s32.totalorder %s114, %s115
      %p124 = scmp.eq.s32.totalorder %s20, 0
      %p125 = por %p123, %p124
      %p126 = scmp.ne.s32.totalorder %s114, %s115
      %p127 = scmp.eq.s32.totalorder %s21, 1
      %p128 = por %p126, %p127
      %p130 = scmp.ne.s32.totalorder %s115, %s129
      %p131 = scmp.eq.s32.totalorder %s21, 0
      %p132 = por %p130, %p131
      %s134 = sadd.s32 %s133, 1
      %p137 = scmp.eq.s32.totalorder %s15, 1
      %p138 = scmp.ne.s32.totalorder %s133, %s135
      %p139 = scmp.eq.s32.totalorder %s15, 0
      %p140 = por %p138, %p139
      %p141 = scmp.ne.s32.totalorder %s133, %s135
      %p142 = scmp.eq.s32.totalorder %s20, 1
      %p143 = por %p141, %p142
      %p144 = scmp.ne.s32.totalorder %s135, %s136
      %p145 = scmp.eq.s32.totalorder %s20, 0
      %p146 = por %p144, %p145
      %p147 = scmp.ne.s32.totalorder %s135, %s136
      %p148 = scmp.eq.s32.totalorder %s21, 1
      %p149 = por %p147, %p148
      %p151 = scmp.ne.s32.totalorder %s136, %s150
      %p152 = scmp.eq.s32.totalorder %s21, 0
      %p153 = por %p151, %p152
      %s154 = ssub.s32 %s15, %s22
      %p155 = scmp.eq.s32.totalorder %s154, 0
      %s157 = sadd.s32 %s156, 1
      %s158 = scalar_select %p155, %s156, %s157
      %p161 = pneg %p155
      %p162 = scmp.eq.s32.totalorder %s15, 1
      %p163 = por %p161, %p162
      %p164 = scmp.ne.s32.totalorder %s156, %s159
      %p165 = scmp.eq.s32.totalorder %s15, 0
      %p166 = por %p164, %p165
      %p167 = scmp.ne.s32.totalorder %s156, %s159
      %p168 = scmp.eq.s32.totalorder %s20, 1
      %p169 = por %p167, %p168
      %p170 = scmp.ne.s32.totalorder %s159, %s160
      %p171 = scmp.eq.s32.totalorder %s20, 0
      %p172 = por %p170, %p171
      %p173 = scmp.ne.s32.totalorder %s159, %s160
      %p174 = scmp.eq.s32.totalorder %s21, 1
      %p175 = por %p173, %p174
      %p177 = scmp.ne.s32.totalorder %s160, %s176
      %p178 = scmp.eq.s32.totalorder %s21, 0
      %p179 = por %p177, %p178
      %p180 = scmp.le.s32.totalorder 1, %s15
      %p181 = scmp.lt.s32.totalorder %s15, 3
      %p182 = pnand %p180, %p181
      %p183 = pneg %p182
      // Predicated region
      $region9: #{tpu_custom_call.1} parent=5 // pred_check
        _
      $region10: #{tpu_custom_call.1} parent=5 // pred_check_branch
        %185 = sbr.rel (%p182) target = $region12
      $region11: #{tpu_custom_call.1} parent=5 // pred_region
        %s186 = ssub.s32 %s15, 1
        // Predicated region
        $region13: #{tpu_custom_call.1} parent=11 // pred_check
          %p187 = pneg %p62
        $region14: #{tpu_custom_call.1} parent=11 // pred_check_branch
          %189 = sbr.rel (%p187) target = $region16
        $region15: #{tpu_custom_call.1} parent=11 // pred_region
          _
        $region16: #{tpu_custom_call.1} parent=11 // pred_fallthru
          _
        // Predicated region
        $region17: #{tpu_custom_call.1} parent=11 // pred_check
          %p190 = pneg %p83
        $region18: #{tpu_custom_call.1} parent=11 // pred_check_branch
          %192 = sbr.rel (%p190) target = $region20
        $region19: #{tpu_custom_call.1} parent=11 // pred_region
          _
        $region20: #{tpu_custom_call.1} parent=11 // pred_fallthru
          _
        // Predicated region
        $region21: #{tpu_custom_call.1} parent=11 // pred_check
          %p193 = pneg %p104
        $region22: #{tpu_custom_call.1} parent=11 // pred_check_branch
          %195 = sbr.rel (%p193) target = $region24
        $region23: #{tpu_custom_call.1} parent=11 // pred_region
          _
        $region24: #{tpu_custom_call.1} parent=11 // pred_fallthru
          _
        // Predicated region
        $region25: #{tpu_custom_call.1} parent=11 // pred_check
          %p196 = pneg %p125
        $region26: #{tpu_custom_call.1} parent=11 // pred_check_branch
          %198 = sbr.rel (%p196) target = $region28
        $region27: #{tpu_custom_call.1} parent=11 // pred_region
          _
        $region28: #{tpu_custom_call.1} parent=11 // pred_fallthru
          _
        // Predicated region
        $region29: #{tpu_custom_call.1} parent=11 // pred_check
          %p199 = pneg %p146
        $region30: #{tpu_custom_call.1} parent=11 // pred_check_branch
          %201 = sbr.rel (%p199) target = $region32
        $region31: #{tpu_custom_call.1} parent=11 // pred_region
          _
        $region32: #{tpu_custom_call.1} parent=11 // pred_fallthru
          _
      $region12: #{tpu_custom_call.1} parent=5 // pred_fallthru
        _
      %p202 = scmp.lt.s32.totalorder %s15, 2
      // Predicated region
      $region33: #{tpu_custom_call.1} parent=5 // pred_check
        %p203 = pneg %p202
      $region34: #{tpu_custom_call.1} parent=5 // pred_check_branch
        %205 = sbr.rel (%p203) target = $region36
      $region35: #{tpu_custom_call.1} parent=5 // pred_region
        // Predicated region
        $region37: #{tpu_custom_call.1} parent=35 // pred_check
          %p206 = pneg %p35
        $region38: #{tpu_custom_call.1} parent=35 // pred_check_branch
          %208 = sbr.rel (%p206) target = $region40
        $region39: #{tpu_custom_call.1} parent=35 // pred_region
          %s209 = smul.u32 8, %s15
          %p210 = scmp.lt.s32.totalorder %s209, 15
          %s211 = scalar_select %p210, %s209, 15
          %s212 = smul.addr %s211, 3
          %s213 = smul.addr %s212, 4
          %s214 = scalar_lea.vmem %s0, %s213
          %s215 = smul.u32 8, %s15
        $region40: #{tpu_custom_call.1} parent=35 // pred_fallthru
          _
      $region36: #{tpu_custom_call.1} parent=5 // pred_fallthru
        _
      %p216 = scmp.le.s32.totalorder 1, %s15
      %p217 = scmp.lt.s32.totalorder %s15, 3
      %p218 = pnand %p216, %p217
      %p219 = pneg %p218
      // Predicated region
      $region41: #{tpu_custom_call.1} parent=5 // pred_check
        _
      $region42: #{tpu_custom_call.1} parent=5 // pred_check_branch
        %221 = sbr.rel (%p218) target = $region44
      $region43: #{tpu_custom_call.1} parent=5 // pred_region
        %s222 = ssub.s32 %s15, 1
        %s223 = smul.u32 8, %s20
        %p224 = scmp.lt.s32.totalorder %s223, 15
        %s225 = scalar_select %p224, %s223, 15
        %s226 = smul.addr %s225, 3
        %s227 = smul.addr %s226, 4
        %s228 = scalar_lea.vmem %s0, %s227
        %p229 = pneg %p41
        %p230 = pneg %p38
        %p231 = pneg %p62
        %p232 = pneg %p59
        %p233 = pneg %p83
        %p234 = pneg %p80
        %p235 = pneg %p104
        %p236 = pneg %p101
        %p237 = pneg %p125
        %p238 = pneg %p122
        %p239 = pneg %p146
        %p240 = pneg %p143
        %p241 = pneg %p172
        %p242 = pneg %p169
        %s243 = sand.u32 %s159, 1
        %s244 = scalar_lea.sflag [#allocation3], %s243
        %s245 = sand.u32 %s159, 1
        %s246 = smul.addr %s245, 8
        %s247 = scalar_lea.vmem [#allocation2], %s246
        %s248 = smul.u32 8, %s20
        %p249 = scmp.lt.s32.totalorder %s248, 15
        %s250 = scalar_select %p249, %s248, 15
        %s251 = smul.addr %s250, 3
        %s252 = smul.addr %s251, 4
        %s253 = scalar_lea.vmem %s0, %s252
        %s254 = smul.u32 8, %s20
        %v256 = vld [vmem:[%s253] sm:$0xf]
        %v257 = vld [vmem:[%s253 + $0x4] sm:$0xf]
        %v258 = vld [vmem:[%s253 + $0x8] sm:$0x1]
        %v259 = vld [vmem:[%s253 + $0xc] sm:$0xf]
        %v260 = vld [vmem:[%s253 + $0x10] sm:$0xf]
        %v261 = vld [vmem:[%s253 + $0x14] sm:$0x1]
        %v262 = vld [vmem:[%s253 + $0x18] sm:$0xf]
        %v263 = vld [vmem:[%s253 + $0x1c] sm:$0xf]
        %v264 = vld [vmem:[%s253 + $0x20] sm:$0x1]
        %v265 = vld [vmem:[%s253 + $0x24] sm:$0xf]
        %v266 = vld [vmem:[%s253 + $0x28] sm:$0xf]
        %v267 = vld [vmem:[%s253 + $0x2c] sm:$0x1]
        %v268 = vld [vmem:[%s253 + $0x30] sm:$0xf]
        %v269 = vld [vmem:[%s253 + $0x34] sm:$0xf]
        %v270 = vld [vmem:[%s253 + $0x38] sm:$0x1]
        %v271 = vld [vmem:[%s253 + $0x3c] sm:$0xf]
        %v272 = vld [vmem:[%s253 + $0x40] sm:$0xf]
        %v273 = vld [vmem:[%s253 + $0x44] sm:$0x1]
        %v274 = vld [vmem:[%s253 + $0x48] sm:$0xf]
        %v275 = vld [vmem:[%s253 + $0x4c] sm:$0xf]
        %v276 = vld [vmem:[%s253 + $0x50] sm:$0x1]
        %v277 = vld [vmem:[%s253 + $0x54] sm:$0xf]
        %v278 = vld [vmem:[%s253 + $0x58] sm:$0xf]
        %v279 = vld [vmem:[%s253 + $0x5c] sm:$0x1]
        %v280 = vld [vmem:[%s1] sm:$0xf]
        %v281 = vld [vmem:[%s1 + $0x4] sm:$0xf]
        %v282 = vld [vmem:[%s1 + $0x8] sm:$0xf]
        %v283 = vld [vmem:[%s1 + $0xc] sm:$0xf]
        %vm284 = vsmask.f32 3328
        %vm285 = vsmask.f32 7440
        %vm286 = vmor %vm284, %vm285
        %v288 = vshrl.u32 %v256, 16
        %v290 = vrot.slane %v288, 4
        %v291 = vshll.u32 %v256, 16
        %v293 = vrot.slane %v291, 5
        %v294 = vor.u32 %v290, %v293
        %v295 = vrot.slane %v294, 4
        %v297 = vshll.u32 %v257, 16
        %v299 = vrot.slane %v297, 5
        %v300 = vsel %vm286, %v295, %v299
        %v301 = vshrl.u32 %v257, 16
        %v303 = vrot.slane %v301, 4
        %v304 = vor.u32 %v303, %v299
        %v305 = vrot.slane %v304, 4
        %v307 = vshll.u32 %v258, 16
        %v309 = vrot.slane %v307, 5
        %v310 = vsel %vm286, %v305, %v309
        %v312 = vshrl.u32 %v259, 16
        %v314 = vrot.slane %v312, 4
        %v315 = vshll.u32 %v259, 16
        %v317 = vrot.slane %v315, 5
        %v318 = vor.u32 %v314, %v317
        %v319 = vrot.slane %v318, 4
        %v321 = vshll.u32 %v260, 16
        %v323 = vrot.slane %v321, 5
        %v324 = vsel %vm286, %v319, %v323
        %v325 = vshrl.u32 %v260, 16
        %v327 = vrot.slane %v325, 4
        %v328 = vor.u32 %v327, %v323
        %v329 = vrot.slane %v328, 4
        %v331 = vshll.u32 %v261, 16
        %v333 = vrot.slane %v331, 5
        %v334 = vsel %vm286, %v329, %v333
        %v336 = vshrl.u32 %v262, 16
        %v338 = vrot.slane %v336, 4
        %v339 = vshll.u32 %v262, 16
        %v341 = vrot.slane %v339, 5
        %v342 = vor.u32 %v338, %v341
        %v343 = vrot.slane %v342, 4
        %v345 = vshll.u32 %v263, 16
        %v347 = vrot.slane %v345, 5
        %v348 = vsel %vm286, %v343, %v347
        %v349 = vshrl.u32 %v263, 16
        %v351 = vrot.slane %v349, 4
        %v352 = vor.u32 %v351, %v347
        %v353 = vrot.slane %v352, 4
        %v355 = vshll.u32 %v264, 16
        %v357 = vrot.slane %v355, 5
        %v358 = vsel %vm286, %v353, %v357
        %v360 = vshrl.u32 %v265, 16
        %v362 = vrot.slane %v360, 4
        %v363 = vshll.u32 %v265, 16
        %v365 = vrot.slane %v363, 5
        %v366 = vor.u32 %v362, %v365
        %v367 = vrot.slane %v366, 4
        %v369 = vshll.u32 %v266, 16
        %v371 = vrot.slane %v369, 5
        %v372 = vsel %vm286, %v367, %v371
        %v373 = vshrl.u32 %v266, 16
        %v375 = vrot.slane %v373, 4
        %v376 = vor.u32 %v375, %v371
        %v377 = vrot.slane %v376, 4
        %v379 = vshll.u32 %v267, 16
        %v381 = vrot.slane %v379, 5
        %v382 = vsel %vm286, %v377, %v381
        %v384 = vshrl.u32 %v268, 16
        %v386 = vrot.slane %v384, 4
        %v387 = vshll.u32 %v268, 16
        %v389 = vrot.slane %v387, 5
        %v390 = vor.u32 %v386, %v389
        %v391 = vrot.slane %v390, 4
        %v393 = vshll.u32 %v269, 16
        %v395 = vrot.slane %v393, 5
        %v396 = vsel %vm286, %v391, %v395
        %v397 = vshrl.u32 %v269, 16
        %v399 = vrot.slane %v397, 4
        %v400 = vor.u32 %v399, %v395
        %v401 = vrot.slane %v400, 4
        %v403 = vshll.u32 %v270, 16
        %v405 = vrot.slane %v403, 5
        %v406 = vsel %vm286, %v401, %v405
        %v408 = vshrl.u32 %v271, 16
        %v410 = vrot.slane %v408, 4
        %v411 = vshll.u32 %v271, 16
        %v413 = vrot.slane %v411, 5
        %v414 = vor.u32 %v410, %v413
        %v415 = vrot.slane %v414, 4
        %v417 = vshll.u32 %v272, 16
        %v419 = vrot.slane %v417, 5
        %v420 = vsel %vm286, %v415, %v419
        %v421 = vshrl.u32 %v272, 16
        %v423 = vrot.slane %v421, 4
        %v424 = vor.u32 %v423, %v419
        %v425 = vrot.slane %v424, 4
        %v427 = vshll.u32 %v273, 16
        %v429 = vrot.slane %v427, 5
        %v430 = vsel %vm286, %v425, %v429
        %v432 = vshrl.u32 %v274, 16
        %v434 = vrot.slane %v432, 4
        %v435 = vshll.u32 %v274, 16
        %v437 = vrot.slane %v435, 5
        %v438 = vor.u32 %v434, %v437
        %v439 = vrot.slane %v438, 4
        %v441 = vshll.u32 %v275, 16
        %v443 = vrot.slane %v441, 5
        %v444 = vsel %vm286, %v439, %v443
        %v445 = vshrl.u32 %v275, 16
        %v447 = vrot.slane %v445, 4
        %v448 = vor.u32 %v447, %v443
        %v449 = vrot.slane %v448, 4
        %v451 = vshll.u32 %v276, 16
        %v453 = vrot.slane %v451, 5
        %v454 = vsel %vm286, %v449, %v453
        %v456 = vshrl.u32 %v277, 16
        %v458 = vrot.slane %v456, 4
        %v459 = vshll.u32 %v277, 16
        %v461 = vrot.slane %v459, 5
        %v462 = vor.u32 %v458, %v461
        %v463 = vrot.slane %v462, 4
        %v465 = vshll.u32 %v278, 16
        %v467 = vrot.slane %v465, 5
        %v468 = vsel %vm286, %v463, %v467
        %v469 = vshrl.u32 %v278, 16
        %v471 = vrot.slane %v469, 4
        %v472 = vor.u32 %v471, %v467
        %v473 = vrot.slane %v472, 4
        %v475 = vshll.u32 %v279, 16
        %v477 = vrot.slane %v475, 5
        %v478 = vsel %vm286, %v473, %v477
        %s479 = scalar_lea.vmem %s1, 16
        %v480 = vld [vmem:[%s479] sm:$0xf]
        %v481 = vld [vmem:[%s479 + $0x4] sm:$0xf]
        %v482 = vld [vmem:[%s479 + $0x8] sm:$0xf]
        %v483 = vld [vmem:[%s479 + $0xc] sm:$0xf]
        %v484 = vunpack.c.l.b16 %v300
        %v485 = vunpack.c.l.b16 %v310
        %v486 = vunpack.c.l.b16 %v324
        %v487 = vunpack.c.l.b16 %v334
        %v488 = vunpack.c.l.b16 %v348
        %v489 = vunpack.c.l.b16 %v358
        %v490 = vunpack.c.l.b16 %v372
        %v491 = vunpack.c.l.b16 %v382
        %v492 = vunpack.c.l.b16 %v396
        %v493 = vunpack.c.l.b16 %v406
        %v494 = vunpack.c.l.b16 %v420
        %v495 = vunpack.c.l.b16 %v430
        %v496 = vunpack.c.l.b16 %v444
        %v497 = vunpack.c.l.b16 %v454
        %v498 = vunpack.c.l.b16 %v468
        %v499 = vunpack.c.l.b16 %v478
        %v500 = vpack.c.b16 %v485, %v484
        %v501 = vpack.c.b16 %v487, %v486
        %v502 = vpack.c.b16 %v489, %v488
        %v503 = vpack.c.b16 %v491, %v490
        %v504 = vpack.c.b16 %v493, %v492
        %v505 = vpack.c.b16 %v495, %v494
        %v506 = vpack.c.b16 %v497, %v496
        %v507 = vpack.c.b16 %v499, %v498
        %v512 = vunpack.c.l.b16 %v480
        %v513 = vunpack.c.l.b16 %v481
        %v514 = vunpack.c.l.b16 %v482
        %v515 = vunpack.c.l.b16 %v483
        %v516 = vpack.c.b16 %v513, %v512
        %v517 = vpack.c.b16 %v515, %v514
        %vm520 = vcmask 261120
        %v522 = vsel %vm520, %v500, 0
        %v525 = vsel %vm520, %v501, 0
        %v528 = vsel %vm520, %v502, 0
        %v531 = vsel %vm520, %v503, 0
        %v534 = vsel %vm520, %v504, 0
        %v537 = vsel %vm520, %v505, 0
        %v540 = vsel %vm520, %v506, 0
        %v543 = vsel %vm520, %v507, 0
        %545 = vmatpush.bf16.msra.mxu0 0
        %546 = vmatpush.bf16.msra.mxu0 0
        %547 = vmatpush.bf16.msra.mxu0 0
        %548 = vmatpush.bf16.msra.mxu0 0
        %549 = vmatpush.bf16.msra.mxu0 0
        %550 = vmatpush.bf16.msra.mxu0 0
        %551 = vmatpush.bf16.msra.mxu0 %v517
        %552 = vmatpush.bf16.msra.mxu0 %v516
        %553 = vmatmul.bf16.gmra.mxu0 %v522
        %v554 = vpop.f32.mrf.mxu0
        %v555 = vadd.f32 0.0, %v554
        %v556 = vpop.f32.mrf.mxu0
        %v557 = vadd.f32 0.0, %v556
        %558 = vmatmul.bf16.gmra.mxu0 %v525
        %v559 = vpop.f32.mrf.mxu0
        %v560 = vadd.f32 0.0, %v559
        %v561 = vpop.f32.mrf.mxu0
        %v562 = vadd.f32 0.0, %v561
        %563 = vmatmul.bf16.gmra.mxu0 %v528
        %v564 = vpop.f32.mrf.mxu0
        %v565 = vadd.f32 0.0, %v564
        %v566 = vpop.f32.mrf.mxu0
        %v567 = vadd.f32 0.0, %v566
        %568 = vmatmul.bf16.gmra.mxu0 %v531
        %v569 = vpop.f32.mrf.mxu0
        %v570 = vadd.f32 0.0, %v569
        %v571 = vpop.f32.mrf.mxu0
        %v572 = vadd.f32 0.0, %v571
        %573 = vmatmul.bf16.gmra.mxu0 %v534
        %v574 = vpop.f32.mrf.mxu0
        %v575 = vadd.f32 0.0, %v574
        %v576 = vpop.f32.mrf.mxu0
        %v577 = vadd.f32 0.0, %v576
        %578 = vmatmul.bf16.gmra.mxu0 %v537
        %v579 = vpop.f32.mrf.mxu0
        %v580 = vadd.f32 0.0, %v579
        %v581 = vpop.f32.mrf.mxu0
        %v582 = vadd.f32 0.0, %v581
        %583 = vmatmul.bf16.gmra.mxu0 %v540
        %v584 = vpop.f32.mrf.mxu0
        %v585 = vadd.f32 0.0, %v584
        %v586 = vpop.f32.mrf.mxu0
        %v587 = vadd.f32 0.0, %v586
        %588 = vmatmul.bf16.gmra.mxu0 %v543
        %v589 = vpop.f32.mrf.mxu0
        %v590 = vadd.f32 0.0, %v589
        %v591 = vpop.f32.mrf.mxu0
        %v592 = vadd.f32 0.0, %v591
        %593 = vdwg.mxu0
        %v610 = vunpack.c.l.b16 %v256
        %v611 = vunpack.c.l.b16 %v257
        %v612 = vunpack.c.l.b16 %v259
        %v613 = vunpack.c.l.b16 %v260
        %v614 = vunpack.c.l.b16 %v262
        %v615 = vunpack.c.l.b16 %v263
        %v616 = vunpack.c.l.b16 %v265
        %v617 = vunpack.c.l.b16 %v266
        %v618 = vunpack.c.l.b16 %v268
        %v619 = vunpack.c.l.b16 %v269
        %v620 = vunpack.c.l.b16 %v271
        %v621 = vunpack.c.l.b16 %v272
        %v622 = vunpack.c.l.b16 %v274
        %v623 = vunpack.c.l.b16 %v275
        %v624 = vunpack.c.l.b16 %v277
        %v625 = vunpack.c.l.b16 %v278
        %v626 = vpack.c.b16 %v611, %v610
        %v627 = vpack.c.b16 %v613, %v612
        %v628 = vpack.c.b16 %v615, %v614
        %v629 = vpack.c.b16 %v617, %v616
        %v630 = vpack.c.b16 %v619, %v618
        %v631 = vpack.c.b16 %v621, %v620
        %v632 = vpack.c.b16 %v623, %v622
        %v633 = vpack.c.b16 %v625, %v624
        %v638 = vunpack.c.l.b16 %v280
        %v639 = vunpack.c.l.b16 %v281
        %v640 = vunpack.c.l.b16 %v282
        %v641 = vunpack.c.l.b16 %v283
        %v642 = vpack.c.b16 %v639, %v638
        %v643 = vpack.c.b16 %v641, %v640
        %v647 = vsel %vm520, %v626, 0
        %v650 = vsel %vm520, %v627, 0
        %v653 = vsel %vm520, %v628, 0
        %v656 = vsel %vm520, %v629, 0
        %v659 = vsel %vm520, %v630, 0
        %v662 = vsel %vm520, %v631, 0
        %v665 = vsel %vm520, %v632, 0
        %v668 = vsel %vm520, %v633, 0
        %670 = vmatpush.bf16.msra.mxu0 0
        %671 = vmatpush.bf16.msra.mxu0 0
        %672 = vmatpush.bf16.msra.mxu0 0
        %673 = vmatpush.bf16.msra.mxu0 0
        %674 = vmatpush.bf16.msra.mxu0 0
        %675 = vmatpush.bf16.msra.mxu0 0
        %676 = vmatpush.bf16.msra.mxu0 %v643
        %677 = vmatpush.bf16.msra.mxu0 %v642
        %678 = vmatmul.bf16.gmra.mxu0 %v647
        %v679 = vpop.f32.mrf.mxu0
        %v680 = vadd.f32 %v555, %v679
        %v681 = vpop.f32.mrf.mxu0
        %v682 = vadd.f32 %v557, %v681
        %683 = vmatmul.bf16.gmra.mxu0 %v650
        %v684 = vpop.f32.mrf.mxu0
        %v685 = vadd.f32 %v560, %v684
        %v686 = vpop.f32.mrf.mxu0
        %v687 = vadd.f32 %v562, %v686
        %688 = vmatmul.bf16.gmra.mxu0 %v653
        %v689 = vpop.f32.mrf.mxu0
        %v690 = vadd.f32 %v565, %v689
        %v691 = vpop.f32.mrf.mxu0
        %v692 = vadd.f32 %v567, %v691
        %693 = vmatmul.bf16.gmra.mxu0 %v656
        %v694 = vpop.f32.mrf.mxu0
        %v695 = vadd.f32 %v570, %v694
        %v696 = vpop.f32.mrf.mxu0
        %v697 = vadd.f32 %v572, %v696
        %698 = vmatmul.bf16.gmra.mxu0 %v659
        %v699 = vpop.f32.mrf.mxu0
        %v700 = vadd.f32 %v575, %v699
        %v701 = vpop.f32.mrf.mxu0
        %v702 = vadd.f32 %v577, %v701
        %703 = vmatmul.bf16.gmra.mxu0 %v662
        %v704 = vpop.f32.mrf.mxu0
        %v705 = vadd.f32 %v580, %v704
        %v706 = vpop.f32.mrf.mxu0
        %v707 = vadd.f32 %v582, %v706
        %708 = vmatmul.bf16.gmra.mxu0 %v665
        %v709 = vpop.f32.mrf.mxu0
        %v710 = vadd.f32 %v585, %v709
        %v711 = vpop.f32.mrf.mxu0
        %v712 = vadd.f32 %v587, %v711
        %713 = vmatmul.bf16.gmra.mxu0 %v668
        %v714 = vpop.f32.mrf.mxu0
        %v715 = vadd.f32 %v590, %v714
        %v716 = vpop.f32.mrf.mxu0
        %v717 = vadd.f32 %v592, %v716
        %718 = vdwg.mxu0
        %vm727 = vcmask 1042432
        %vm728 = vcmask 1046532
        %vm729 = vmor %vm727, %vm728
        %v730 = vrot.slane %v256, 5
        %v731 = vrot.slane %v730, 4
        %v732 = vrot.slane %v257, 5
        %v733 = vsel %vm729, %v731, %v732
        %v734 = vrot.slane %v732, 4
        %v735 = vrot.slane %v258, 5
        %v736 = vsel %vm729, %v734, %v735
        %v737 = vrot.slane %v259, 5
        %v738 = vrot.slane %v737, 4
        %v739 = vrot.slane %v260, 5
        %v740 = vsel %vm729, %v738, %v739
        %v741 = vrot.slane %v739, 4
        %v742 = vrot.slane %v261, 5
        %v743 = vsel %vm729, %v741, %v742
        %v744 = vrot.slane %v262, 5
        %v745 = vrot.slane %v744, 4
        %v746 = vrot.slane %v263, 5
        %v747 = vsel %vm729, %v745, %v746
        %v748 = vrot.slane %v746, 4
        %v749 = vrot.slane %v264, 5
        %v750 = vsel %vm729, %v748, %v749
        %v751 = vrot.slane %v265, 5
        %v752 = vrot.slane %v751, 4
        %v753 = vrot.slane %v266, 5
        %v754 = vsel %vm729, %v752, %v753
        %v755 = vrot.slane %v753, 4
        %v756 = vrot.slane %v267, 5
        %v757 = vsel %vm729, %v755, %v756
        %v758 = vrot.slane %v268, 5
        %v759 = vrot.slane %v758, 4
        %v760 = vrot.slane %v269, 5
        %v761 = vsel %vm729, %v759, %v760
        %v762 = vrot.slane %v760, 4
        %v763 = vrot.slane %v270, 5
        %v764 = vsel %vm729, %v762, %v763
        %v765 = vrot.slane %v271, 5
        %v766 = vrot.slane %v765, 4
        %v767 = vrot.slane %v272, 5
        %v768 = vsel %vm729, %v766, %v767
        %v769 = vrot.slane %v767, 4
        %v770 = vrot.slane %v273, 5
        %v771 = vsel %vm729, %v769, %v770
        %v772 = vrot.slane %v274, 5
        %v773 = vrot.slane %v772, 4
        %v774 = vrot.slane %v275, 5
        %v775 = vsel %vm729, %v773, %v774
        %v776 = vrot.slane %v774, 4
        %v777 = vrot.slane %v276, 5
        %v778 = vsel %vm729, %v776, %v777
        %v779 = vrot.slane %v277, 5
        %v780 = vrot.slane %v779, 4
        %v781 = vrot.slane %v278, 5
        %v782 = vsel %vm729, %v780, %v781
        %v783 = vrot.slane %v781, 4
        %v784 = vrot.slane %v279, 5
        %v785 = vsel %vm729, %v783, %v784
        %s786 = scalar_lea.vmem %s1, 32
        %v787 = vld [vmem:[%s786] sm:$0xf]
        %v788 = vld [vmem:[%s786 + $0x4] sm:$0xf]
        %v789 = vld [vmem:[%s786 + $0x8] sm:$0xf]
        %v790 = vld [vmem:[%s786 + $0xc] sm:$0xf]
        %v791 = vunpack.c.l.b16 %v733
        %v792 = vunpack.c.l.b16 %v736
        %v793 = vunpack.c.l.b16 %v740
        %v794 = vunpack.c.l.b16 %v743
        %v795 = vunpack.c.l.b16 %v747
        %v796 = vunpack.c.l.b16 %v750
        %v797 = vunpack.c.l.b16 %v754
        %v798 = vunpack.c.l.b16 %v757
        %v799 = vunpack.c.l.b16 %v761
        %v800 = vunpack.c.l.b16 %v764
        %v801 = vunpack.c.l.b16 %v768
        %v802 = vunpack.c.l.b16 %v771
        %v803 = vunpack.c.l.b16 %v775
        %v804 = vunpack.c.l.b16 %v778
        %v805 = vunpack.c.l.b16 %v782
        %v806 = vunpack.c.l.b16 %v785
        %v807 = vpack.c.b16 %v792, %v791
        %v808 = vpack.c.b16 %v794, %v793
        %v809 = vpack.c.b16 %v796, %v795
        %v810 = vpack.c.b16 %v798, %v797
        %v811 = vpack.c.b16 %v800, %v799
        %v812 = vpack.c.b16 %v802, %v801
        %v813 = vpack.c.b16 %v804, %v803
        %v814 = vpack.c.b16 %v806, %v805
        %v819 = vunpack.c.l.b16 %v787
        %v820 = vunpack.c.l.b16 %v788
        %v821 = vunpack.c.l.b16 %v789
        %v822 = vunpack.c.l.b16 %v790
        %v823 = vpack.c.b16 %v820, %v819
        %v824 = vpack.c.b16 %v822, %v821
        %v828 = vsel %vm520, %v807, 0
        %v831 = vsel %vm520, %v808, 0
        %v834 = vsel %vm520, %v809, 0
        %v837 = vsel %vm520, %v810, 0
        %v840 = vsel %vm520, %v811, 0
        %v843 = vsel %vm520, %v812, 0
        %v846 = vsel %vm520, %v813, 0
        %v849 = vsel %vm520, %v814, 0
        %851 = vmatpush.bf16.msra.mxu0 0
        %852 = vmatpush.bf16.msra.mxu0 0
        %853 = vmatpush.bf16.msra.mxu0 0
        %854 = vmatpush.bf16.msra.mxu0 0
        %855 = vmatpush.bf16.msra.mxu0 0
        %856 = vmatpush.bf16.msra.mxu0 0
        %857 = vmatpush.bf16.msra.mxu0 %v824
        %858 = vmatpush.bf16.msra.mxu0 %v823
        %859 = vmatmul.bf16.gmra.mxu0 %v828
        %v860 = vpop.f32.mrf.mxu0
        %v861 = vadd.f32 0.0, %v860
        %v862 = vpop.f32.mrf.mxu0
        %v863 = vadd.f32 0.0, %v862
        %864 = vmatmul.bf16.gmra.mxu0 %v831
        %v865 = vpop.f32.mrf.mxu0
        %v866 = vadd.f32 0.0, %v865
        %v867 = vpop.f32.mrf.mxu0
        %v868 = vadd.f32 0.0, %v867
        %869 = vmatmul.bf16.gmra.mxu0 %v834
        %v870 = vpop.f32.mrf.mxu0
        %v871 = vadd.f32 0.0, %v870
        %v872 = vpop.f32.mrf.mxu0
        %v873 = vadd.f32 0.0, %v872
        %874 = vmatmul.bf16.gmra.mxu0 %v837
        %v875 = vpop.f32.mrf.mxu0
        %v876 = vadd.f32 0.0, %v875
        %v877 = vpop.f32.mrf.mxu0
        %v878 = vadd.f32 0.0, %v877
        %879 = vmatmul.bf16.gmra.mxu0 %v840
        %v880 = vpop.f32.mrf.mxu0
        %v881 = vadd.f32 0.0, %v880
        %v882 = vpop.f32.mrf.mxu0
        %v883 = vadd.f32 0.0, %v882
        %884 = vmatmul.bf16.gmra.mxu0 %v843
        %v885 = vpop.f32.mrf.mxu0
        %v886 = vadd.f32 0.0, %v885
        %v887 = vpop.f32.mrf.mxu0
        %v888 = vadd.f32 0.0, %v887
        %889 = vmatmul.bf16.gmra.mxu0 %v846
        %v890 = vpop.f32.mrf.mxu0
        %v891 = vadd.f32 0.0, %v890
        %v892 = vpop.f32.mrf.mxu0
        %v893 = vadd.f32 0.0, %v892
        %894 = vmatmul.bf16.gmra.mxu0 %v849
        %v895 = vpop.f32.mrf.mxu0
        %v896 = vadd.f32 0.0, %v895
        %v897 = vpop.f32.mrf.mxu0
        %v898 = vadd.f32 0.0, %v897
        %899 = vdwg.mxu0
        %v900 = vadd.f32 %v680, %v861
        %v901 = vadd.f32 %v682, %v863
        %v902 = vadd.f32 %v685, %v866
        %v903 = vadd.f32 %v687, %v868
        %v904 = vadd.f32 %v690, %v871
        %v905 = vadd.f32 %v692, %v873
        %v906 = vadd.f32 %v695, %v876
        %v907 = vadd.f32 %v697, %v878
        %v908 = vadd.f32 %v700, %v881
        %v909 = vadd.f32 %v702, %v883
        %v910 = vadd.f32 %v705, %v886
        %v911 = vadd.f32 %v707, %v888
        %v912 = vadd.f32 %v710, %v891
        %v913 = vadd.f32 %v712, %v893
        %v914 = vadd.f32 %v715, %v896
        %v915 = vadd.f32 %v717, %v898
        %v916 = vld [vmem:[%s2] sm:$0x1]
        %v918 = vperm.slane %v916, 0
        %v920 = vadd.f32 %v900, %v918
        %v921 = vadd.f32 %v901, %v918
        %v922 = vadd.f32 %v902, %v918
        %v923 = vadd.f32 %v903, %v918
        %v924 = vadd.f32 %v904, %v918
        %v925 = vadd.f32 %v905, %v918
        %v926 = vadd.f32 %v906, %v918
        %v927 = vadd.f32 %v907, %v918
        %v928 = vadd.f32 %v908, %v918
        %v929 = vadd.f32 %v909, %v918
        %v930 = vadd.f32 %v910, %v918
        %v931 = vadd.f32 %v911, %v918
        %v932 = vadd.f32 %v912, %v918
        %v933 = vadd.f32 %v913, %v918
        %v934 = vadd.f32 %v914, %v918
        %v935 = vadd.f32 %v915, %v918
        %v936 = vmax.f32 %v920, 0.0
        %v937 = vmax.f32 %v921, 0.0
        %v938 = vmax.f32 %v922, 0.0
        %v939 = vmax.f32 %v923, 0.0
        %v940 = vmax.f32 %v924, 0.0
        %v941 = vmax.f32 %v925, 0.0
        %v942 = vmax.f32 %v926, 0.0
        %v943 = vmax.f32 %v927, 0.0
        %v944 = vmax.f32 %v928, 0.0
        %v945 = vmax.f32 %v929, 0.0
        %v946 = vmax.f32 %v930, 0.0
        %v947 = vmax.f32 %v931, 0.0
        %v948 = vmax.f32 %v932, 0.0
        %v949 = vmax.f32 %v933, 0.0
        %v950 = vmax.f32 %v934, 0.0
        %v951 = vmax.f32 %v935, 0.0
        %v952 = vadd.f32 %v936, %v937
        %v953 = vrot.slane %v952, 4
        %v954 = vadd.f32 %v952, %v953
        %v955 = vrot.slane %v954, 2
        %v956 = vadd.f32 %v954, %v955
        %v957 = vrot.slane %v956, 1
        %v958 = vadd.f32 %v956, %v957
        %v959 = vadd.f32 %v938, %v939
        %v960 = vrot.slane %v959, 4
        %v961 = vadd.f32 %v959, %v960
        %v962 = vrot.slane %v961, 2
        %v963 = vadd.f32 %v961, %v962
        %v964 = vrot.slane %v963, 1
        %v965 = vadd.f32 %v963, %v964
        %v966 = vadd.f32 %v940, %v941
        %v967 = vrot.slane %v966, 4
        %v968 = vadd.f32 %v966, %v967
        %v969 = vrot.slane %v968, 2
        %v970 = vadd.f32 %v968, %v969
        %v971 = vrot.slane %v970, 1
        %v972 = vadd.f32 %v970, %v971
        %v973 = vadd.f32 %v942, %v943
        %v974 = vrot.slane %v973, 4
        %v975 = vadd.f32 %v973, %v974
        %v976 = vrot.slane %v975, 2
        %v977 = vadd.f32 %v975, %v976
        %v978 = vrot.slane %v977, 1
        %v979 = vadd.f32 %v977, %v978
        %v980 = vadd.f32 %v944, %v945
        %v981 = vrot.slane %v980, 4
        %v982 = vadd.f32 %v980, %v981
        %v983 = vrot.slane %v982, 2
        %v984 = vadd.f32 %v982, %v983
        %v985 = vrot.slane %v984, 1
        %v986 = vadd.f32 %v984, %v985
        %v987 = vadd.f32 %v946, %v947
        %v988 = vrot.slane %v987, 4
        %v989 = vadd.f32 %v987, %v988
        %v990 = vrot.slane %v989, 2
        %v991 = vadd.f32 %v989, %v990
        %v992 = vrot.slane %v991, 1
        %v993 = vadd.f32 %v991, %v992
        %v994 = vadd.f32 %v948, %v949
        %v995 = vrot.slane %v994, 4
        %v996 = vadd.f32 %v994, %v995
        %v997 = vrot.slane %v996, 2
        %v998 = vadd.f32 %v996, %v997
        %v999 = vrot.slane %v998, 1
        %v1000 = vadd.f32 %v998, %v999
        %v1001 = vadd.f32 %v950, %v951
        %v1002 = vrot.slane %v1001, 4
        %v1003 = vadd.f32 %v1001, %v1002
        %v1004 = vrot.slane %v1003, 2
        %v1005 = vadd.f32 %v1003, %v1004
        %v1006 = vrot.slane %v1005, 1
        %v1007 = vadd.f32 %v1005, %v1006
        %v1008 = vrcp.pop 16.0
        %v1009 = vmul.f32 16.0, %v1008
        %v1010 = vsub.f32 1.0, %v1009
        %v1011 = vmul.f32 %v1008, %v1010
        %v1012 = vadd.f32 %v1008, %v1011
        %vm1013 = vweird.f32 %v1008
        %v1014 = vsel %vm1013, %v1008, %v1012
        %v1015 = vmul.f32 %v958, %v1014
        %v1016 = vmul.f32 %v965, %v1014
        %v1017 = vmul.f32 %v972, %v1014
        %v1018 = vmul.f32 %v979, %v1014
        %v1019 = vmul.f32 %v986, %v1014
        %v1020 = vmul.f32 %v993, %v1014
        %v1021 = vmul.f32 %v1000, %v1014
        %v1022 = vmul.f32 %v1007, %v1014
        %v1023 = vsub.f32 %v936, %v1015
        %v1024 = vsub.f32 %v937, %v1015
        %v1025 = vsub.f32 %v938, %v1016
        %v1026 = vsub.f32 %v939, %v1016
        %v1027 = vsub.f32 %v940, %v1017
        %v1028 = vsub.f32 %v941, %v1017
        %v1029 = vsub.f32 %v942, %v1018
        %v1030 = vsub.f32 %v943, %v1018
        %v1031 = vsub.f32 %v944, %v1019
        %v1032 = vsub.f32 %v945, %v1019
        %v1033 = vsub.f32 %v946, %v1020
        %v1034 = vsub.f32 %v947, %v1020
        %v1035 = vsub.f32 %v948, %v1021
        %v1036 = vsub.f32 %v949, %v1021
        %v1037 = vsub.f32 %v950, %v1022
        %v1038 = vsub.f32 %v951, %v1022
        %v1039 = vmul.f32 %v1023, %v1023
        %v1040 = vmul.f32 %v1024, %v1024
        %v1041 = vmul.f32 %v1025, %v1025
        %v1042 = vmul.f32 %v1026, %v1026
        %v1043 = vmul.f32 %v1027, %v1027
        %v1044 = vmul.f32 %v1028, %v1028
        %v1045 = vmul.f32 %v1029, %v1029
        %v1046 = vmul.f32 %v1030, %v1030
        %v1047 = vmul.f32 %v1031, %v1031
        %v1048 = vmul.f32 %v1032, %v1032
        %v1049 = vmul.f32 %v1033, %v1033
        %v1050 = vmul.f32 %v1034, %v1034
        %v1051 = vmul.f32 %v1035, %v1035
        %v1052 = vmul.f32 %v1036, %v1036
        %v1053 = vmul.f32 %v1037, %v1037
        %v1054 = vmul.f32 %v1038, %v1038
        %v1055 = vadd.f32 %v1039, %v1040
        %v1056 = vrot.slane %v1055, 4
        %v1057 = vadd.f32 %v1055, %v1056
        %v1058 = vrot.slane %v1057, 2
        %v1059 = vadd.f32 %v1057, %v1058
        %v1060 = vrot.slane %v1059, 1
        %v1061 = vadd.f32 %v1059, %v1060
        %v1062 = vadd.f32 %v1041, %v1042
        %v1063 = vrot.slane %v1062, 4
        %v1064 = vadd.f32 %v1062, %v1063
        %v1065 = vrot.slane %v1064, 2
        %v1066 = vadd.f32 %v1064, %v1065
        %v1067 = vrot.slane %v1066, 1
        %v1068 = vadd.f32 %v1066, %v1067
        %v1069 = vadd.f32 %v1043, %v1044
        %v1070 = vrot.slane %v1069, 4
        %v1071 = vadd.f32 %v1069, %v1070
        %v1072 = vrot.slane %v1071, 2
        %v1073 = vadd.f32 %v1071, %v1072
        %v1074 = vrot.slane %v1073, 1
        %v1075 = vadd.f32 %v1073, %v1074
        %v1076 = vadd.f32 %v1045, %v1046
        %v1077 = vrot.slane %v1076, 4
        %v1078 = vadd.f32 %v1076, %v1077
        %v1079 = vrot.slane %v1078, 2
        %v1080 = vadd.f32 %v1078, %v1079
        %v1081 = vrot.slane %v1080, 1
        %v1082 = vadd.f32 %v1080, %v1081
        %v1083 = vadd.f32 %v1047, %v1048
        %v1084 = vrot.slane %v1083, 4
        %v1085 = vadd.f32 %v1083, %v1084
        %v1086 = vrot.slane %v1085, 2
        %v1087 = vadd.f32 %v1085, %v1086
        %v1088 = vrot.slane %v1087, 1
        %v1089 = vadd.f32 %v1087, %v1088
        %v1090 = vadd.f32 %v1049, %v1050
        %v1091 = vrot.slane %v1090, 4
        %v1092 = vadd.f32 %v1090, %v1091
        %v1093 = vrot.slane %v1092, 2
        %v1094 = vadd.f32 %v1092, %v1093
        %v1095 = vrot.slane %v1094, 1
        %v1096 = vadd.f32 %v1094, %v1095
        %v1097 = vadd.f32 %v1051, %v1052
        %v1098 = vrot.slane %v1097, 4
        %v1099 = vadd.f32 %v1097, %v1098
        %v1100 = vrot.slane %v1099, 2
        %v1101 = vadd.f32 %v1099, %v1100
        %v1102 = vrot.slane %v1101, 1
        %v1103 = vadd.f32 %v1101, %v1102
        %v1104 = vadd.f32 %v1053, %v1054
        %v1105 = vrot.slane %v1104, 4
        %v1106 = vadd.f32 %v1104, %v1105
        %v1107 = vrot.slane %v1106, 2
        %v1108 = vadd.f32 %v1106, %v1107
        %v1109 = vrot.slane %v1108, 1
        %v1110 = vadd.f32 %v1108, %v1109
        %v1111 = vmul.f32 %v1061, %v1014
        %v1112 = vmul.f32 %v1068, %v1014
        %v1113 = vmul.f32 %v1075, %v1014
        %v1114 = vmul.f32 %v1082, %v1014
        %v1115 = vmul.f32 %v1089, %v1014
        %v1116 = vmul.f32 %v1096, %v1014
        %v1117 = vmul.f32 %v1103, %v1014
        %v1118 = vmul.f32 %v1110, %v1014
        %v1119 = vadd.f32 %v1111, 1e-05
        %v1120 = vadd.f32 %v1112, 1e-05
        %v1121 = vadd.f32 %v1113, 1e-05
        %v1122 = vadd.f32 %v1114, 1e-05
        %v1123 = vadd.f32 %v1115, 1e-05
        %v1124 = vadd.f32 %v1116, 1e-05
        %v1125 = vadd.f32 %v1117, 1e-05
        %v1126 = vadd.f32 %v1118, 1e-05
        %v1127 = vrsqrt.pop %v1119
        %v1128 = vmul.f32 %v1127, %v1119
        %v1129 = vmul.f32 %v1128, %v1127
        %v1130 = vmul.f32 0.5, %v1129
        %v1131 = vsub.f32 1.5, %v1130
        %v1132 = vmul.f32 %v1127, %v1131
        %v1133 = vmul.f32 %v1119, %v1132
        %vm1134 = vcmp.eq.f32.partialorder %v1119, inf
        %v1135 = vsel %vm1134, %v1119, %v1133
        %vm1136 = vcmp.eq.f32.partialorder %v1119, 0.0
        %v1137 = vand.u32 %v1119, 2147483648
        %v1138 = vsel %vm1136, %v1137, %v1135
        %v1139 = vrsqrt.pop %v1120
        %v1140 = vmul.f32 %v1139, %v1120
        %v1141 = vmul.f32 %v1140, %v1139
        %v1142 = vmul.f32 0.5, %v1141
        %v1143 = vsub.f32 1.5, %v1142
        %v1144 = vmul.f32 %v1139, %v1143
        %v1145 = vmul.f32 %v1120, %v1144
        %vm1146 = vcmp.eq.f32.partialorder %v1120, inf
        %v1147 = vsel %vm1146, %v1120, %v1145
        %vm1148 = vcmp.eq.f32.partialorder %v1120, 0.0
        %v1149 = vand.u32 %v1120, 2147483648
        %v1150 = vsel %vm1148, %v1149, %v1147
        %v1151 = vrsqrt.pop %v1121
        %v1152 = vmul.f32 %v1151, %v1121
        %v1153 = vmul.f32 %v1152, %v1151
        %v1154 = vmul.f32 0.5, %v1153
        %v1155 = vsub.f32 1.5, %v1154
        %v1156 = vmul.f32 %v1151, %v1155
        %v1157 = vmul.f32 %v1121, %v1156
        %vm1158 = vcmp.eq.f32.partialorder %v1121, inf
        %v1159 = vsel %vm1158, %v1121, %v1157
        %vm1160 = vcmp.eq.f32.partialorder %v1121, 0.0
        %v1161 = vand.u32 %v1121, 2147483648
        %v1162 = vsel %vm1160, %v1161, %v1159
        %v1163 = vrsqrt.pop %v1122
        %v1164 = vmul.f32 %v1163, %v1122
        %v1165 = vmul.f32 %v1164, %v1163
        %v1166 = vmul.f32 0.5, %v1165
        %v1167 = vsub.f32 1.5, %v1166
        %v1168 = vmul.f32 %v1163, %v1167
        %v1169 = vmul.f32 %v1122, %v1168
        %vm1170 = vcmp.eq.f32.partialorder %v1122, inf
        %v1171 = vsel %vm1170, %v1122, %v1169
        %vm1172 = vcmp.eq.f32.partialorder %v1122, 0.0
        %v1173 = vand.u32 %v1122, 2147483648
        %v1174 = vsel %vm1172, %v1173, %v1171
        %v1175 = vrsqrt.pop %v1123
        %v1176 = vmul.f32 %v1175, %v1123
        %v1177 = vmul.f32 %v1176, %v1175
        %v1178 = vmul.f32 0.5, %v1177
        %v1179 = vsub.f32 1.5, %v1178
        %v1180 = vmul.f32 %v1175, %v1179
        %v1181 = vmul.f32 %v1123, %v1180
        %vm1182 = vcmp.eq.f32.partialorder %v1123, inf
        %v1183 = vsel %vm1182, %v1123, %v1181
        %vm1184 = vcmp.eq.f32.partialorder %v1123, 0.0
        %v1185 = vand.u32 %v1123, 2147483648
        %v1186 = vsel %vm1184, %v1185, %v1183
        %v1187 = vrsqrt.pop %v1124
        %v1188 = vmul.f32 %v1187, %v1124
        %v1189 = vmul.f32 %v1188, %v1187
        %v1190 = vmul.f32 0.5, %v1189
        %v1191 = vsub.f32 1.5, %v1190
        %v1192 = vmul.f32 %v1187, %v1191
        %v1193 = vmul.f32 %v1124, %v1192
        %vm1194 = vcmp.eq.f32.partialorder %v1124, inf
        %v1195 = vsel %vm1194, %v1124, %v1193
        %vm1196 = vcmp.eq.f32.partialorder %v1124, 0.0
        %v1197 = vand.u32 %v1124, 2147483648
        %v1198 = vsel %vm1196, %v1197, %v1195
        %v1199 = vrsqrt.pop %v1125
        %v1200 = vmul.f32 %v1199, %v1125
        %v1201 = vmul.f32 %v1200, %v1199
        %v1202 = vmul.f32 0.5, %v1201
        %v1203 = vsub.f32 1.5, %v1202
        %v1204 = vmul.f32 %v1199, %v1203
        %v1205 = vmul.f32 %v1125, %v1204
        %vm1206 = vcmp.eq.f32.partialorder %v1125, inf
        %v1207 = vsel %vm1206, %v1125, %v1205
        %vm1208 = vcmp.eq.f32.partialorder %v1125, 0.0
        %v1209 = vand.u32 %v1125, 2147483648
        %v1210 = vsel %vm1208, %v1209, %v1207
        %v1211 = vrsqrt.pop %v1126
        %v1212 = vmul.f32 %v1211, %v1126
        %v1213 = vmul.f32 %v1212, %v1211
        %v1214 = vmul.f32 0.5, %v1213
        %v1215 = vsub.f32 1.5, %v1214
        %v1216 = vmul.f32 %v1211, %v1215
        %v1217 = vmul.f32 %v1126, %v1216
        %vm1218 = vcmp.eq.f32.partialorder %v1126, inf
        %v1219 = vsel %vm1218, %v1126, %v1217
        %vm1220 = vcmp.eq.f32.partialorder %v1126, 0.0
        %v1221 = vand.u32 %v1126, 2147483648
        %v1222 = vsel %vm1220, %v1221, %v1219
        %v1223 = vpack.c.bf16 %v1015, %v1015
        %v1224 = vpack.c.bf16 %v1016, %v1016
        %v1225 = vpack.c.bf16 %v1017, %v1017
        %v1226 = vpack.c.bf16 %v1018, %v1018
        %v1227 = vpack.c.bf16 %v1019, %v1019
        %v1228 = vpack.c.bf16 %v1020, %v1020
        %v1229 = vpack.c.bf16 %v1021, %v1021
        %v1230 = vpack.c.bf16 %v1022, %v1022
        %v1231 = vld [vmem:[%s3] sm:$0xf]
        %v1232 = vld [vmem:[%s3 + $0x4] sm:$0xf]
        %v1233 = vld [vmem:[%s3 + $0x8] sm:$0xf]
        %v1234 = vld [vmem:[%s3 + $0xc] sm:$0xf]
        %v1235 = vld [vmem:[%s3 + $0x10] sm:$0xf]
        %v1236 = vld [vmem:[%s3 + $0x14] sm:$0xf]
        %v1237 = vld [vmem:[%s3 + $0x18] sm:$0xf]
        %v1238 = vld [vmem:[%s3 + $0x1c] sm:$0xf]
        %v1239 = vld [vmem:[%s3 + $0x20] sm:$0xf]
        %v1240 = vld [vmem:[%s3 + $0x24] sm:$0xf]
        %v1241 = vld [vmem:[%s3 + $0x28] sm:$0xf]
        %v1242 = vld [vmem:[%s3 + $0x2c] sm:$0xf]
        %v1243 = vld [vmem:[%s3 + $0x30] sm:$0xf]
        %v1244 = vld [vmem:[%s3 + $0x34] sm:$0xf]
        %v1245 = vld [vmem:[%s3 + $0x38] sm:$0xf]
        %v1246 = vld [vmem:[%s3 + $0x3c] sm:$0xf]
        %v1247 = vpack.c.bf16 %v1138, %v1138
        %v1248 = vpack.c.bf16 %v1150, %v1150
        %v1249 = vpack.c.bf16 %v1162, %v1162
        %v1250 = vpack.c.bf16 %v1174, %v1174
        %v1251 = vpack.c.bf16 %v1186, %v1186
        %v1252 = vpack.c.bf16 %v1198, %v1198
        %v1253 = vpack.c.bf16 %v1210, %v1210
        %v1254 = vpack.c.bf16 %v1222, %v1222
        %v1255 = vld [vmem:[%s4] sm:$0xf]
        %v1256 = vld [vmem:[%s4 + $0x4] sm:$0xf]
        %v1257 = vld [vmem:[%s4 + $0x8] sm:$0xf]
        %v1258 = vld [vmem:[%s4 + $0xc] sm:$0xf]
        %v1259 = vld [vmem:[%s4 + $0x10] sm:$0xf]
        %v1260 = vld [vmem:[%s4 + $0x14] sm:$0xf]
        %v1261 = vld [vmem:[%s4 + $0x18] sm:$0xf]
        %v1262 = vld [vmem:[%s4 + $0x1c] sm:$0xf]
        %v1263 = vld [vmem:[%s4 + $0x20] sm:$0xf]
        %v1264 = vld [vmem:[%s4 + $0x24] sm:$0xf]
        %v1265 = vld [vmem:[%s4 + $0x28] sm:$0xf]
        %v1266 = vld [vmem:[%s4 + $0x2c] sm:$0xf]
        %v1267 = vld [vmem:[%s4 + $0x30] sm:$0xf]
        %v1268 = vld [vmem:[%s4 + $0x34] sm:$0xf]
        %v1269 = vld [vmem:[%s4 + $0x38] sm:$0xf]
        %v1270 = vld [vmem:[%s4 + $0x3c] sm:$0xf]
        %v1279 = vunpack.c.l.b16 %v1247
        %v1280 = vunpack.c.l.b16 %v1248
        %v1281 = vunpack.c.l.b16 %v1249
        %v1282 = vunpack.c.l.b16 %v1250
        %v1283 = vunpack.c.l.b16 %v1251
        %v1284 = vunpack.c.l.b16 %v1252
        %v1285 = vunpack.c.l.b16 %v1253
        %v1286 = vunpack.c.l.b16 %v1254
        %vm1287 = vcmask 1041409
        %v1288 = vsel %vm1287, %v1280, %v1279
        %vm1289 = vcmask 1042434
        %v1290 = vsel %vm1289, %v1281, %v1288
        %vm1291 = vcmask 1043459
        %v1292 = vsel %vm1291, %v1282, %v1290
        %vm1293 = vcmask 1044484
        %v1294 = vsel %vm1293, %v1283, %v1292
        %vm1295 = vcmask 1045509
        %v1296 = vsel %vm1295, %v1284, %v1294
        %vm1297 = vcmask 1046534
        %v1298 = vsel %vm1297, %v1285, %v1296
        %vm1299 = vcmask 1047559
        %v1300 = vsel %vm1299, %v1286, %v1298
        %v1301 = vpack.c.b16 %v1300, %v1300
        %v1319 = vunpack.c.l.b16 %v1255
        %v1320 = vunpack.c.l.b16 %v1256
        %v1321 = vunpack.c.l.b16 %v1257
        %v1322 = vunpack.c.l.b16 %v1258
        %v1323 = vunpack.c.l.b16 %v1259
        %v1324 = vunpack.c.l.b16 %v1260
        %v1325 = vunpack.c.l.b16 %v1261
        %v1326 = vunpack.c.l.b16 %v1262
        %v1327 = vunpack.c.l.b16 %v1263
        %v1328 = vunpack.c.l.b16 %v1264
        %v1329 = vunpack.c.l.b16 %v1265
        %v1330 = vunpack.c.l.b16 %v1266
        %v1331 = vunpack.c.l.b16 %v1267
        %v1332 = vunpack.c.l.b16 %v1268
        %v1333 = vunpack.c.l.b16 %v1269
        %v1334 = vunpack.c.l.b16 %v1270
        %v1335 = vpack.c.b16 %v1320, %v1319
        %v1336 = vpack.c.b16 %v1322, %v1321
        %v1337 = vpack.c.b16 %v1324, %v1323
        %v1338 = vpack.c.b16 %v1326, %v1325
        %v1339 = vpack.c.b16 %v1328, %v1327
        %v1340 = vpack.c.b16 %v1330, %v1329
        %v1341 = vpack.c.b16 %v1332, %v1331
        %v1342 = vpack.c.b16 %v1334, %v1333
        %1351 = vmatpush.bf16.msra.mxu0 %v1342
        %1352 = vmatpush.bf16.msra.mxu0 %v1341
        %1353 = vmatpush.bf16.msra.mxu0 %v1340
        %1354 = vmatpush.bf16.msra.mxu0 %v1339
        %1355 = vmatpush.bf16.msra.mxu0 %v1338
        %1356 = vmatpush.bf16.msra.mxu0 %v1337
        %1357 = vmatpush.bf16.msra.mxu0 %v1336
        %1358 = vmatpush.bf16.msra.mxu0 %v1335
        %1359 = vmatmul.bf16.gmra.mxu0 %v1301
        %v1360 = vpop.f32.mrf.mxu0
        %v1361 = vadd.f32 0.0, %v1360
        %v1362 = vpop.f32.mrf.mxu0
        %1363 = vdwg.mxu0
        %v1372 = vunpack.c.l.b16 %v1223
        %v1373 = vunpack.c.l.b16 %v1224
        %v1374 = vunpack.c.l.b16 %v1225
        %v1375 = vunpack.c.l.b16 %v1226
        %v1376 = vunpack.c.l.b16 %v1227
        %v1377 = vunpack.c.l.b16 %v1228
        %v1378 = vunpack.c.l.b16 %v1229
        %v1379 = vunpack.c.l.b16 %v1230
        %v1380 = vsel %vm1287, %v1373, %v1372
        %v1381 = vsel %vm1289, %v1374, %v1380
        %v1382 = vsel %vm1291, %v1375, %v1381
        %v1383 = vsel %vm1293, %v1376, %v1382
        %v1384 = vsel %vm1295, %v1377, %v1383
        %v1385 = vsel %vm1297, %v1378, %v1384
        %v1386 = vsel %vm1299, %v1379, %v1385
        %v1387 = vpack.c.b16 %v1386, %v1386
        %v1405 = vunpack.c.l.b16 %v1231
        %v1406 = vunpack.c.l.b16 %v1232
        %v1407 = vunpack.c.l.b16 %v1233
        %v1408 = vunpack.c.l.b16 %v1234
        %v1409 = vunpack.c.l.b16 %v1235
        %v1410 = vunpack.c.l.b16 %v1236
        %v1411 = vunpack.c.l.b16 %v1237
        %v1412 = vunpack.c.l.b16 %v1238
        %v1413 = vunpack.c.l.b16 %v1239
        %v1414 = vunpack.c.l.b16 %v1240
        %v1415 = vunpack.c.l.b16 %v1241
        %v1416 = vunpack.c.l.b16 %v1242
        %v1417 = vunpack.c.l.b16 %v1243
        %v1418 = vunpack.c.l.b16 %v1244
        %v1419 = vunpack.c.l.b16 %v1245
        %v1420 = vunpack.c.l.b16 %v1246
        %v1421 = vpack.c.b16 %v1406, %v1405
        %v1422 = vpack.c.b16 %v1408, %v1407
        %v1423 = vpack.c.b16 %v1410, %v1409
        %v1424 = vpack.c.b16 %v1412, %v1411
        %v1425 = vpack.c.b16 %v1414, %v1413
        %v1426 = vpack.c.b16 %v1416, %v1415
        %v1427 = vpack.c.b16 %v1418, %v1417
        %v1428 = vpack.c.b16 %v1420, %v1419
        %1437 = vmatpush.bf16.msra.mxu0 %v1428
        %1438 = vmatpush.bf16.msra.mxu0 %v1427
        %1439 = vmatpush.bf16.msra.mxu0 %v1426
        %1440 = vmatpush.bf16.msra.mxu0 %v1425
        %1441 = vmatpush.bf16.msra.mxu0 %v1424
        %1442 = vmatpush.bf16.msra.mxu0 %v1423
        %1443 = vmatpush.bf16.msra.mxu0 %v1422
        %1444 = vmatpush.bf16.msra.mxu0 %v1421
        %1445 = vmatmul.bf16.gmra.mxu0 %v1387
        %v1446 = vpop.f32.mrf.mxu0
        %v1447 = vadd.f32 %v1361, %v1446
        %v1448 = vpop.f32.mrf.mxu0
        %1449 = vdwg.mxu0
        %v1450 = vld [vmem:[%s5] sm:$0x1]
        %v1452 = vperm.slane %v1450, 0
        %v1454 = vadd.f32 %v1447, %v1452
        %1455 = vst [vmem:[%s247] sm:$0xff] %v1454
        %s1456 = sand.u32 %s159, 1
        %s1457 = scalar_lea.sflag [#allocation3], %s1456
        %s1458 = sand.u32 %s159, 1
        %s1459 = smul.addr %s1458, 8
        %s1460 = scalar_lea.vmem [#allocation2], %s1459
        // Predicated region
        $region45: #{tpu_custom_call.1} parent=43 // pred_check
          %p1461 = pneg %p169
        $region46: #{tpu_custom_call.1} parent=43 // pred_check_branch
          %1463 = sbr.rel (%p1461) target = $region48
        $region47: #{tpu_custom_call.1} parent=43 // pred_region
          %1465 = vsyncadd %s1457, 0
          %s1466 = smul.addr %s20, 8
          %s1467 = scalar_lea.hbm %s6, %s1466
          %s1469 = sshll.u32 %s1460, 4
          %s1470 = int_to_ptr.vmem [resolvable:$true] %s1469
          %s1471 = sshll.u32 %s1467, 4
          %s1472 = int_to_ptr.hbm [resolvable:$true] %s1471
          %1474 = dma.vmem_to_hbm [thread:$0]  %s1470, 128, %s1472, %s1457
        $region48: #{tpu_custom_call.1} parent=43 // pred_fallthru
          _
      $region44: #{tpu_custom_call.1} parent=5 // pred_fallthru
        _
      %p1475 = scmp.le.s32.totalorder 2, %s15
      // Predicated region
      $region49: #{tpu_custom_call.1} parent=5 // pred_check
        %p1476 = pneg %p1475
      $region50: #{tpu_custom_call.1} parent=5 // pred_check_branch
        %1478 = sbr.rel (%p1476) target = $region52
      $region51: #{tpu_custom_call.1} parent=5 // pred_region
        %s1479 = ssub.s32 %s15, 2
        // Predicated region
        $region53: #{tpu_custom_call.1} parent=51 // pred_check
          %p1480 = pneg %p175
        $region54: #{tpu_custom_call.1} parent=51 // pred_check_branch
          %1482 = sbr.rel (%p1480) target = $region56
        $region55: #{tpu_custom_call.1} parent=51 // pred_region
          %s1483 = sand.u32 %s160, 1
          %s1484 = scalar_lea.sflag [#allocation3], %s1483
          %s1485 = sand.u32 %s160, 1
          %s1486 = smul.addr %s1485, 8
          %s1487 = scalar_lea.vmem [#allocation2], %s1486
          %1489 = dma.done %s1484, 128
        $region56: #{tpu_custom_call.1} parent=51 // pred_fallthru
          _
      $region52: #{tpu_custom_call.1} parent=5 // pred_fallthru
        _
    $region6: #{tpu_custom_call.1} parent=1 // loop_footer
      %s19 = sadd.s32 1, %s15
    $region7: #{tpu_custom_call.1} parent=1 // loop_footer_branch
      %14 = sbr.rel target = $region3
    $region8: #{tpu_custom_call.1} parent=1 // loop_exit
      _
    %1490 = vsyncpa [#allocation3], 1
    %s1491 = scalar_lea.sflag [#allocation3], 1
    %1492 = vsyncpa %s1491, 1

</llo_original>
